<compile_context>
chip_gen: v7x
topology: tpu7x:2x2x1
jax: 0.10.0
libtpu: 0.0.40
codegen_flags: <defaults>
</compile_context>

<pallas_src>
import functools

import jax
import jax.numpy as jnp
from jax.experimental import pallas as pl
from jax.experimental.pallas import tpu as pltpu


def _denorm_kernel(mean_ref, std_ref, x_ref, o_ref, *, tr):
    # mean_ref / std_ref: (padded_rows, 1) f32, resident for the whole sweep.
    # x_ref / o_ref:      (tr, H*W) tile in x.dtype.
    r = pl.program_id(0)
    start = pl.multiple_of(r * tr, tr)
    mean = mean_ref[pl.ds(start, tr), :]          # (tr, 1)
    std = std_ref[pl.ds(start, tr), :]            # (tr, 1)
    x = x_ref[...].astype(jnp.float32)
    y = std * x + mean                            # broadcast (tr,1) over (tr,HW)
    o_ref[...] = jnp.clip(y, 0.0, 100.0).astype(o_ref.dtype)


def _vmem_capacity_bytes():
    """Per-core VMEM capacity; conservative fallback if the query fails."""
    try:
        return int(pltpu.get_tpu_info().vmem_capacity_bytes)
    except Exception:
        return 64 << 20   # v7x-sized (smallest current generation)


def _pick_row_tile(rows, cols, itemsize, vmem_cap):
    """Row-tile (TR) choice: big enough to amortize per-step overhead, small
    enough that the double-buffered in+out working set fits VMEM, aligned to
    the dtype's sublane packing, and leaving >= 2 grid steps when possible."""
    pack = max(8, 32 // max(itemsize, 1))              # 8 f32, 16 bf16, 32 int8
    # ~vmem_cap/16 per tile => ~4x tile double-buffered working set ~ cap/4.
    target_bytes = min(8 << 20, max(vmem_cap // 16, 1 << 20))
    tr = (target_bytes // max(cols * itemsize, 1)) // pack * pack
    tr = max(pack, int(tr))
    # Keep >= 2 grid steps so v7x's two TensorCores both get work.
    if rows >= 2 * pack:
        half = (rows // 2) // pack * pack              # >= pack
        tr = min(tr, half)
    if tr >= rows:
        tr = rows                                      # full dim is always legal
    return tr, pack


def denormalize(x, mean, std, donate_x=False):
    """x: (N, C, H, W); mean, std: (C,) broadcast over (N, H, W).
    Returns clamp(std * x + mean, 0, 100) with x's dtype."""
    N, C, H, W = x.shape
    rows, cols = N * C, H * W
    itemsize = jnp.dtype(x.dtype).itemsize

    # Free reshape for contiguous NCHW; makes the last dim lane-dense.
    x2d = x.reshape(rows, cols)

    vmem_cap = _vmem_capacity_bytes()
    tr, _pack = _pick_row_tile(rows, cols, itemsize, vmem_cap)
    num_tiles = pl.cdiv(rows, tr)
    padded_rows = num_tiles * tr

    # Per-row (= per (n, c)) scale/offset columns in f32, padded so the
    # in-kernel pl.ds slice is always in bounds on the last (partial) tile.
    mean_col = jnp.broadcast_to(
        jnp.asarray(mean, jnp.float32).reshape(1, C), (N, C)).reshape(rows, 1)
    std_col = jnp.broadcast_to(
        jnp.asarray(std, jnp.float32).reshape(1, C), (N, C)).reshape(rows, 1)
    if padded_rows != rows:
        pad = ((0, padded_rows - rows), (0, 0))
        mean_col = jnp.pad(mean_col, pad)
        std_col = jnp.pad(std_col, pad)

    # Explicit scoped-VMEM budget: 2 buffers x (in tile + out tile) + resident
    # columns + slack; capped well below the physical capacity.
    tile_bytes = tr * cols * itemsize
    col_bytes = 2 * padded_rows * 128 * 4          # lane-padded column slabs
    vmem_limit = 4 * tile_bytes + 2 * col_bytes + (4 << 20)
    vmem_limit = int(min(max(vmem_limit, 32 << 20), (vmem_cap * 3) // 4))

    kwargs = {}
    if donate_x:
        # Footprint-only optimization (no throughput change): alias x
        # (input index 2) onto the output. Caller must actually donate x
        # under jit (donate_argnums) for this to matter.
        kwargs["input_output_aliases"] = {2: 0}

    out2d = pl.pallas_call(
        functools.partial(_denorm_kernel, tr=tr),
        out_shape=jax.ShapeDtypeStruct((rows, cols), x.dtype),
        grid=(num_tiles,),
        in_specs=[
            # Resident parameter columns: full array, same block every step.
            pl.BlockSpec((padded_rows, 1), lambda r: (0, 0)),   # mean
            pl.BlockSpec((padded_rows, 1), lambda r: (0, 0)),   # std
            pl.BlockSpec((tr, cols), lambda r: (r, 0)),          # x row-chunk
        ],
        out_specs=pl.BlockSpec((tr, cols), lambda r: (r, 0)),
        compiler_params=pltpu.CompilerParams(
            dimension_semantics=("parallel",),
            vmem_limit_bytes=vmem_limit),
        cost_estimate=pl.CostEstimate(
            flops=2 * rows * cols,
            transcendentals=0,
            bytes_accessed=2 * rows * cols * itemsize + 8 * padded_rows),
        **kwargs,
    )(mean_col, std_col, x2d)

    return out2d.reshape(N, C, H, W)


if __name__ == "__main__":
    key = jax.random.PRNGKey(0)
    N, C, H, W = 2, 4, 16, 16

    x = jax.random.normal(key, (N, C, H, W), dtype=jnp.float32)

    # Deterministic "parameters" (the module's __init__ just stores mean/std).
    mean = jnp.array([0.485, 0.456, 0.406, 0.5], dtype=jnp.float32) * 100.0
    std = jnp.array([0.229, 0.224, 0.225, 0.25], dtype=jnp.float32) * 100.0

    out = denormalize(x, mean, std)
    out = jax.block_until_ready(out)

    # Pure-JAX reference check (same semantics as the PyTorch forward:
    # clamp(std * x + mean, min=0, max=100)).
    ref = jnp.clip(std[None, :, None, None] * x + mean[None, :, None, None],
                   0.0, 100.0)
    assert out.shape == (N, C, H, W)
    assert out.dtype == x.dtype
    assert jnp.allclose(out, ref, atol=1e-5, rtol=1e-5)

    print("KERNEL_OK")
</pallas_src>

<mosaic_0001>
module attributes {stable_mosaic.version = 11 : i64} {
  func.func @_denorm_kernel(%arg0: i32, %arg1: memref<8x1xf32, #tpu.memory_space<vmem>>, %arg2: memref<8x1xf32, #tpu.memory_space<vmem>>, %arg3: memref<8x256xf32, #tpu.memory_space<vmem>>, %arg4: memref<8x256xf32, #tpu.memory_space<vmem>>) attributes {dimension_semantics = [#tpu.dimension_semantics<parallel>], iteration_bounds = array<i64: 1>, scalar_prefetch = 0 : i64, scratch_operands = 0 : i64, tpu.core_type = #tpu.core_type<tc>, window_params = [{pipeline_mode = #tpu.pipeline_mode<synchronous>, transform_indices = @transform_0, window_bounds = array<i64: 8, 1>}, {pipeline_mode = #tpu.pipeline_mode<synchronous>, transform_indices = @transform_1, window_bounds = array<i64: 8, 1>}, {transform_indices = @transform_2, window_bounds = array<i64: 8, 256>}, {transform_indices = @transform_3, window_bounds = array<i64: 8, 256>}]} {
    %c8_i32 = arith.constant 8 : i32
    %0 = arith.muli %arg0, %c8_i32 : i32
    %1 = tpu.assume_multiple %0, 8 : i32
    %2 = arith.index_cast %1 : i32 to index
    %c0 = arith.constant 0 : index
    %3 = vector.load %arg1[%2, %c0] : memref<8x1xf32, #tpu.memory_space<vmem>>, vector<8x1xf32>
    %4 = arith.index_cast %1 : i32 to index
    %c0_0 = arith.constant 0 : index
    %5 = vector.load %arg2[%4, %c0_0] : memref<8x1xf32, #tpu.memory_space<vmem>>, vector<8x1xf32>
    %c0_1 = arith.constant 0 : index
    %c0_2 = arith.constant 0 : index
    %6 = vector.load %arg3[%c0_1, %c0_2] : memref<8x256xf32, #tpu.memory_space<vmem>>, vector<8x256xf32>
    %7 = vector.broadcast %5 : vector<8x1xf32> to vector<8x256xf32>
    %8 = arith.mulf %7, %6 : vector<8x256xf32>
    %9 = vector.broadcast %3 : vector<8x1xf32> to vector<8x256xf32>
    %10 = arith.addf %8, %9 : vector<8x256xf32>
    %cst = arith.constant 0.000000e+00 : f32
    %cst_3 = arith.constant 1.000000e+02 : f32
    %11 = vector.broadcast %cst : f32 to vector<8x256xf32>
    %12 = arith.maximumf %11, %10 : vector<8x256xf32>
    %13 = vector.broadcast %cst_3 : f32 to vector<8x256xf32>
    %14 = arith.minimumf %13, %12 : vector<8x256xf32>
    %c0_4 = arith.constant 0 : index
    %c0_5 = arith.constant 0 : index
    %15 = vector.load %arg4[%c0_4, %c0_5] : memref<8x256xf32, #tpu.memory_space<vmem>>, vector<8x256xf32>
    tpu.vector_store %arg4[%c0_4, %c0_5], %14 {strides = array<i32>} : memref<8x256xf32, #tpu.memory_space<vmem>>, vector<8x256xf32>,
    return
  }
  func.func @transform_0(%arg0: i32) -> (i32, i32) {
    %c0_i32 = arith.constant 0 : i32
    %c0_i32_0 = arith.constant 0 : i32
    %c0_i32_1 = arith.constant 0 : i32
    return %c0_i32, %c0_i32_0 : i32, i32
  }
  func.func @transform_1(%arg0: i32) -> (i32, i32) {
    %c0_i32 = arith.constant 0 : i32
    %c0_i32_0 = arith.constant 0 : i32
    %c0_i32_1 = arith.constant 0 : i32
    return %c0_i32, %c0_i32_0 : i32, i32
  }
  func.func @transform_2(%arg0: i32) -> (i32, i32) {
    %c0_i32 = arith.constant 0 : i32
    %c0_i32_0 = arith.constant 0 : i32
    return %arg0, %c0_i32 : i32, i32
  }
  func.func @transform_3(%arg0: i32) -> (i32, i32) {
    %c0_i32 = arith.constant 0 : i32
    %c0_i32_0 = arith.constant 0 : i32
    return %arg0, %c0_i32 : i32, i32
  }
}

</mosaic_0001>

<llo_original>
// kernel: tpu_custom_call.1
$region0: #{tpu_custom_call.1}
  #allocation0 [shape = 'u32[]', space=smem, size = 0x4, offset = 0x4, fixed_abs, tag = 'smem constant byte address 0x4 - core index']
  #allocation1 [shape = 'u32[144,128]{1,0:T(1,128)}', space=vmem, size = 0x12000, scoped, tag = 'internal scratch']
  %s0 = inlined_call_operand.vmem [shape: f32[8,1], index: 0, kind: input, shape index: {}]
  %s1 = inlined_call_operand.vmem [shape: f32[8,1], index: 1, kind: input, shape index: {}]
  %s2 = inlined_call_operand.vmem [shape: f32[8,256], index: 2, kind: input, shape index: {}]
  %s3 = inlined_call_operand.hbm [shape: f32[8,256], index: 3, kind: output, shape index: {}]
  %s4 = sld [smem:[#allocation0]]
  $region22: #{tpu_custom_call.1} parent=0
    _
  %s6 = ssub.s32 1, %s4
  %s7 = scalar_select 0, %s6, %s4
  $region1: #{tpu_custom_call.1} parent=0
    #allocation2 [shape = 'u8[8192]{0}', space=vmem, size = 0x2000, scoped, tag = 'output window, operand 0, single buffered']
    #allocation3 [shape = 's32[1]{0}', space=sflag, size = 0x4, scoped, tag = 'scoped memory for tpu_custom_call.1']
    %8 = vsyncpa [#allocation3], 0
    // Predicated region
    $region2: #{tpu_custom_call.1} parent=1 // pred_check
      _
    $region3: #{tpu_custom_call.1} parent=1 // pred_check_branch
      %10 = sbr.rel (0) target = $region5
    $region4: #{tpu_custom_call.1} parent=1 // pred_region
      _
    $region5: #{tpu_custom_call.1} parent=1 // pred_fallthru
      _
    // Predicated region
    $region6: #{tpu_custom_call.1} parent=1 // pred_check
      _
    $region7: #{tpu_custom_call.1} parent=1 // pred_check_branch
      %12 = sbr.rel (0) target = $region9
    $region8: #{tpu_custom_call.1} parent=1 // pred_region
      _
    $region9: #{tpu_custom_call.1} parent=1 // pred_fallthru
      _
    // Predicated region
    $region10: #{tpu_custom_call.1} parent=1 // pred_check
      _
    $region11: #{tpu_custom_call.1} parent=1 // pred_check_branch
      %14 = sbr.rel (0) target = $region13
    $region12: #{tpu_custom_call.1} parent=1 // pred_region
      _
    $region13: #{tpu_custom_call.1} parent=1 // pred_fallthru
      _
    %s15 = smul.u32 0, 8
    %s16 = scalar_lea.vmem %s0, %s15
    %v17 = vld [vmem:[%s16] sm:$0xff]
    %s18 = scalar_lea.vmem %s1, %s15
    %v19 = vld [vmem:[%s18] sm:$0xff]
    %v20 = vld [vmem:[%s2] sm:$0xff]
    %v21 = vld [vmem:[%s2 + $0x8] sm:$0xff]
    %23 = vset.pattern.permute.xlu0 0
    %24 = vperm.xlu0 %23, %v19
    %v25 = vpop.permute.xlu0 %24
    %v27 = vmul.f32 %v25, %v20
    %v28 = vmul.f32 %v25, %v21
    %30 = vset.pattern.permute.xlu0 0
    %31 = vperm.xlu0 %30, %v17
    %v32 = vpop.permute.xlu0 %31
    %v34 = vadd.f32 %v27, %v32
    %v35 = vadd.f32 %v28, %v32
    %v36 = vmax.f32 %v34, 0.0
    %v37 = vmax.f32 %v35, 0.0
    %v38 = vmin.f32 %v36, 100.0
    %v39 = vmin.f32 %v37, 100.0
    %40 = vst [vmem:[#allocation2] sm:$0xff] %v38
    %41 = vst [vmem:[#allocation2 + $0x8] sm:$0xff] %v39
    // Predicated region
    $region14: #{tpu_custom_call.1} parent=1 // pred_check
      _
    $region15: #{tpu_custom_call.1} parent=1 // pred_check_branch
      %43 = sbr.rel (0) target = $region17
    $region16: #{tpu_custom_call.1} parent=1 // pred_region
      %s45 = ssub.s32 256, 256
      %46 = vsyncadd [#allocation3], %s45
      %s48 = sshll.u32 [#allocation2], 4
      %s49 = int_to_ptr.vmem [resolvable:$true] %s48
      %51 = dma.vmem_to_hbm [thread:$0]  %s49, 256, %s3, [#allocation3]
    $region17: #{tpu_custom_call.1} parent=1 // pred_fallthru
      _
    // Predicated region
    $region18: #{tpu_custom_call.1} parent=1 // pred_check
      _
    $region19: #{tpu_custom_call.1} parent=1 // pred_check_branch
      %53 = sbr.rel (0) target = $region21
    $region20: #{tpu_custom_call.1} parent=1 // pred_region
      %54 = dma.done [#allocation3], 256
    $region21: #{tpu_custom_call.1} parent=1 // pred_fallthru
      _
    %55 = vsyncpa [#allocation3], 1

</llo_original>
